<compile_context>
chip_gen: v6e
topology: v6e:2x2x1
jax: 0.10.0
libtpu: 0.0.40
codegen_flags: <defaults>
</compile_context>

<pallas_src>
import jax
import jax.numpy as jnp
from jax import lax
from jax.experimental import pallas as pl
from jax.experimental.pallas import tpu as pltpu

_LANES = 128


def _make_nll_kernel(eps, num_classes, total_valid, tiles_per_shard):
    is_pow2 = (num_classes & (num_classes - 1)) == 0

    def kernel(x_ref, y_ref, w_ref, num_ref, den_ref, acc_num, acc_den):
        step = pl.program_id(1)  # reduction ("arbitrary") axis

        @pl.when(step == 0)
        def _init():
            acc_num[...] = jnp.zeros_like(acc_num)
            acc_den[...] = jnp.zeros_like(acc_den)

        x = x_ref[...].astype(jnp.float32)   # (TR, 128) flat-view probabilities
        y = y_ref[...].astype(jnp.int32)     # (TR, 128) per-element target class
        w_row = w_ref[...]                   # (1, 128)  weight of each lane's class

        tr = x.shape[0]
        lane = lax.broadcasted_iota(jnp.int32, x.shape, 1)
        row = lax.broadcasted_iota(jnp.int32, x.shape, 0)
        if is_pow2:
            lane_cls = jnp.bitwise_and(lane, num_classes - 1)
        else:
            lane_cls = lane % num_classes

        # Global flat element index; masks both the <128-alignment pad region
        # and any garbage from a partial (overhanging) last block.
        tile_idx = pl.program_id(0) * tiles_per_shard + step
        base = tile_idx * (tr * _LANES)
        flat_idx = base + row * _LANES + lane
        m = jnp.logical_and(lane_cls == y, flat_idx < total_valid)

        # log over the dense tile: full vregs for the EUP, no lane shuffles.
        logp = jnp.log(x + eps)
        num_c = jnp.where(m, w_row * logp, 0.0)   # select (NaN-safe), not multiply
        den_c = jnp.where(m, w_row, 0.0)

        if tr % 8 == 0:
            # vreg-aligned: group rows into (8,128) vregs and add them (pure VPU).
            acc_num[...] += num_c.reshape(tr // 8, 8, _LANES).sum(axis=0)
            acc_den[...] += den_c.reshape(tr // 8, 8, _LANES).sum(axis=0)
        else:
            # Tiny inputs only (total rows < 8): single partial-vreg tile.
            acc_num[0:1, :] += jnp.sum(num_c, axis=0, keepdims=True)
            acc_den[0:1, :] += jnp.sum(den_c, axis=0, keepdims=True)

        @pl.when(step == pl.num_programs(1) - 1)
        def _finalize():
            num_ref[...] = acc_num[...]
            den_ref[...] = acc_den[...]

    return kernel


def _device_kind():
    try:
        return (jax.devices()[0].device_kind or "").lower()
    except Exception:
        return ""


def _default_block_bytes(kind):
    if "7" in kind:          # v7x: faster HBM -> bigger blocks to amortize per-step overhead
        return 4 << 20
    if "v6" in kind:         # v6e
        return 2 << 20
    return 1 << 20           # v5e and older: ~1 MiB already saturates HBM


def _default_max_shards(kind):
    # Only v7x-class chips have 2 TensorCores worth sharding the reduction over.
    return 2 if "7" in kind else 1


def nll_loss_pallas(x, y, class_weights, eps, *, block_bytes=None, max_shards=None):
    """x: (N, C) probabilities, y: (N,) int labels, class_weights: (C,) floats."""
    n, c = x.shape
    if _LANES % c != 0:
        # TODO(synk): support class counts that do not divide 128 (needs a
        # different lane packing); not required for this audio-classification cfg.
        raise NotImplementedError("num_classes must divide 128")

    kind = _device_kind()
    if block_bytes is None:
        block_bytes = _default_block_bytes(kind)
    if max_shards is None:
        max_shards = _default_max_shards(kind)

    itemsize = jnp.dtype(x.dtype).itemsize
    total = n * c
    rows = pl.cdiv(total, _LANES)
    padded = rows * _LANES

    label_dtype = jnp.int8 if c <= 127 else jnp.int32
    x_flat = x.reshape(-1)                               # free (bitcast) reshape
    y_flat = jnp.repeat(y.astype(label_dtype), c)        # 1 byte / element
    if padded != total:
        # Only hit when N*C is not 128-aligned; pads < 128 elements (one copy).
        # TODO(synk): avoid this copy entirely with a 1-D BlockSpec + in-kernel reshape.
        x_flat = jnp.pad(x_flat, (0, padded - total))
        y_flat = jnp.pad(y_flat, (0, padded - total))
    x2 = x_flat.reshape(rows, _LANES)
    y2 = y_flat.reshape(rows, _LANES)
    w_row = jnp.tile(class_weights.astype(jnp.float32).reshape(-1),
                     _LANES // c).reshape(1, _LANES)

    # Tile rows: multiple of 32 (dense for f32/bf16/int8 packing), sized from
    # the HBM-byte budget; tiny inputs use a single full-extent block.
    if rows <= 32:
        tile_rows = rows
    else:
        tile_rows = max(32, min(rows, block_bytes // (_LANES * itemsize)) // 32 * 32)
    total_tiles = pl.cdiv(rows, tile_rows)

    shards = 1
    if max_shards > 1 and total_tiles >= 8 * max_shards:
        shards = max_shards
    tiles_per_shard = pl.cdiv(total_tiles, shards)
    last_block = total_tiles - 1

    if shards * tiles_per_shard == total_tiles:
        def data_map(s, i, _tps=tiles_per_shard):
            return (s * _tps + i, 0)
    else:
        # Rounded-up grid: clamp empty tiles onto the last real block; the
        # in-kernel flat-index mask zeroes their contribution.
        def data_map(s, i, _tps=tiles_per_shard, _last=last_block):
            return (jnp.minimum(s * _tps + i, _last), 0)

    kernel = _make_nll_kernel(float(eps), c, total, tiles_per_shard)

    num_out, den_out = pl.pallas_call(
        kernel,
        out_shape=(
            jax.ShapeDtypeStruct((shards * 8, _LANES), jnp.float32),
            jax.ShapeDtypeStruct((shards * 8, _LANES), jnp.float32),
        ),
        grid=(shards, tiles_per_shard),
        in_specs=[
            pl.BlockSpec((tile_rows, _LANES), data_map),
            pl.BlockSpec((tile_rows, _LANES), data_map),
            pl.BlockSpec((1, _LANES), lambda s, i: (0, 0)),
        ],
        out_specs=(
            pl.BlockSpec((8, _LANES), lambda s, i: (s, 0)),
            pl.BlockSpec((8, _LANES), lambda s, i: (s, 0)),
        ),
        scratch_shapes=[
            pltpu.VMEM((8, _LANES), jnp.float32),   # lane-wise numerator partials
            pltpu.VMEM((8, _LANES), jnp.float32),   # lane-wise denominator partials
        ],
        compiler_params=pltpu.CompilerParams(
            dimension_semantics=("parallel", "arbitrary"),
            vmem_limit_bytes=32 * 1024 * 1024,
        ),
    )(x2, y2, w_row)

    num_total = jnp.sum(num_out)   # sum_n w[y_n] * log(x[n, y_n] + eps)
    den_total = jnp.sum(den_out)   # sum_n w[y_n]
    # TODO(synk): den_total == 0 yields inf/nan (matches PyTorch nan behavior);
    # ignore_index semantics are not implemented.
    return -num_total / den_total


if __name__ == "__main__":
    key = jax.random.PRNGKey(0)
    k1, k2 = jax.random.split(key)

    N, C = 1100, 4                    # batch of samples, 4 audio classes
    eps = 1e-7                        # cfg.TRAIN.EPSILON
    class_weights = jnp.array([1.0, 2.0, 0.5, 1.5], dtype=jnp.float32)

    # X are probabilities (the module applies log itself).
    logits = jax.random.normal(k1, (N, C), dtype=jnp.float32)
    X = jax.nn.softmax(logits, axis=-1)
    Y = jax.random.randint(k2, (N,), 0, C, dtype=jnp.int32)

    # Small block_bytes here just forces a multi-tile grid (+ partial last
    # block) at this tiny demo size; production sizes use the default budget.
    loss = nll_loss_pallas(X, Y, class_weights, eps, block_bytes=16 * 1024)
    loss = jax.block_until_ready(loss)

    # Mirror the module's NaN guard ("损失为Nan") on the host side.
    if bool(jnp.isnan(loss)):
        raise RuntimeError("损失为Nan")

    # Cross-check against a pure-JAX reference of weighted NLL.
    logp = jnp.log(X + eps)
    w_n = class_weights[Y]
    ref = -jnp.sum(w_n * logp[jnp.arange(N), Y]) / jnp.sum(w_n)
    assert jnp.allclose(loss, ref, rtol=1e-5, atol=1e-6), (loss, ref)

    print("KERNEL_OK")
</pallas_src>

<mosaic_0001>
module attributes {stable_mosaic.version = 11 : i64} {
  func.func @kernel(%arg0: i32, %arg1: i32, %arg2: memref<32x128xf32, #tpu.memory_space<vmem>>, %arg3: memref<32x128xi8, #tpu.memory_space<vmem>>, %arg4: memref<1x128xf32, #tpu.memory_space<vmem>>, %arg5: memref<8x128xf32, #tpu.memory_space<vmem>>, %arg6: memref<8x128xf32, #tpu.memory_space<vmem>>, %arg7: memref<8x128xf32, #tpu.memory_space<vmem>>, %arg8: memref<8x128xf32, #tpu.memory_space<vmem>>) attributes {dimension_semantics = [#tpu.dimension_semantics<parallel>, #tpu.dimension_semantics<arbitrary>], iteration_bounds = array<i64: 1, 2>, scalar_prefetch = 0 : i64, scratch_operands = 2 : i64, tpu.core_type = #tpu.core_type<tc>, window_params = [{transform_indices = @transform_0, window_bounds = array<i64: 32, 128>}, {transform_indices = @transform_1, window_bounds = array<i64: 32, 128>}, {pipeline_mode = #tpu.pipeline_mode<synchronous>, transform_indices = @transform_2, window_bounds = array<i64: 1, 128>}, {transform_indices = @transform_3, window_bounds = array<i64: 8, 128>}, {transform_indices = @transform_4, window_bounds = array<i64: 8, 128>}]} {
    %c0_i32 = arith.constant 0 : i32
    %0 = arith.cmpi eq, %arg1, %c0_i32 : i32
    %1 = arith.extui %0 : i1 to i32
    %c0_i32_0 = arith.constant 0 : i32
    %2 = arith.cmpi ne, %1, %c0_i32_0 : i32
    scf.if %2 {
      %cst_19 = arith.constant 0.000000e+00 : f32
      %47 = vector.broadcast %cst_19 : f32 to vector<8x128xf32>
      %c0_20 = arith.constant 0 : index
      %c0_21 = arith.constant 0 : index
      %48 = vector.load %arg7[%c0_20, %c0_21] : memref<8x128xf32, #tpu.memory_space<vmem>>, vector<8x128xf32>
      tpu.vector_store %arg7[%c0_20, %c0_21], %47 {strides = array<i32>} : memref<8x128xf32, #tpu.memory_space<vmem>>, vector<8x128xf32>,
      %cst_22 = arith.constant 0.000000e+00 : f32
      %49 = vector.broadcast %cst_22 : f32 to vector<8x128xf32>
      %c0_23 = arith.constant 0 : index
      %c0_24 = arith.constant 0 : index
      %50 = vector.load %arg8[%c0_23, %c0_24] : memref<8x128xf32, #tpu.memory_space<vmem>>, vector<8x128xf32>
      tpu.vector_store %arg8[%c0_23, %c0_24], %49 {strides = array<i32>} : memref<8x128xf32, #tpu.memory_space<vmem>>, vector<8x128xf32>,
    } else {
    }
    %c0 = arith.constant 0 : index
    %c0_1 = arith.constant 0 : index
    %3 = vector.load %arg2[%c0, %c0_1] : memref<32x128xf32, #tpu.memory_space<vmem>>, vector<32x128xf32>
    %c0_2 = arith.constant 0 : index
    %c0_3 = arith.constant 0 : index
    %4 = vector.load %arg3[%c0_2, %c0_3] : memref<32x128xi8, #tpu.memory_space<vmem>>, vector<32x128xi8>
    %5 = arith.extsi %4 : vector<32x128xi8> to vector<32x128xi32>
    %c0_4 = arith.constant 0 : index
    %c0_5 = arith.constant 0 : index
    %6 = vector.load %arg4[%c0_4, %c0_5] : memref<1x128xf32, #tpu.memory_space<vmem>>, vector<1x128xf32>
    %7 = tpu.iota {dimensions = array<i32: 1>} : vector<32x128xi32>
    %8 = tpu.iota {dimensions = array<i32: 0>} : vector<32x128xi32>
    %c3_i32 = arith.constant 3 : i32
    %9 = vector.broadcast %c3_i32 : i32 to vector<32x128xi32>
    %10 = arith.andi %7, %9 : vector<32x128xi32>
    %c2_i32 = arith.constant 2 : i32
    %11 = arith.muli %arg0, %c2_i32 : i32
    %12 = arith.addi %11, %arg1 : i32
    %c4096_i32 = arith.constant 4096 : i32
    %13 = arith.muli %12, %c4096_i32 : i32
    %c128_i32 = arith.constant 128 : i32
    %14 = vector.broadcast %c128_i32 : i32 to vector<32x128xi32>
    %15 = arith.muli %8, %14 : vector<32x128xi32>
    %16 = vector.broadcast %13 : i32 to vector<32x128xi32>
    %17 = arith.addi %16, %15 : vector<32x128xi32>
    %18 = arith.addi %17, %7 : vector<32x128xi32>
    %19 = arith.cmpi eq, %10, %5 : vector<32x128xi32>
    %c4400_i32 = arith.constant 4400 : i32
    %20 = vector.broadcast %c4400_i32 : i32 to vector<32x128xi32>
    %21 = arith.cmpi slt, %18, %20 : vector<32x128xi32>
    %22 = arith.andi %19, %21 : vector<32x128xi1>
    %cst = arith.constant 1.000000e-07 : f32
    %23 = vector.broadcast %cst : f32 to vector<32x128xf32>
    %24 = arith.addf %3, %23 : vector<32x128xf32>
    %25 = math.log %24 : vector<32x128xf32>
    %26 = vector.broadcast %6 : vector<1x128xf32> to vector<32x128xf32>
    %27 = arith.mulf %26, %25 : vector<32x128xf32>
    %cst_6 = arith.constant 0.000000e+00 : f32
    %28 = vector.broadcast %cst_6 : f32 to vector<32x128xf32>
    %29 = arith.select %22, %27, %28 : vector<32x128xi1>, vector<32x128xf32>
    %cst_7 = arith.constant 0.000000e+00 : f32
    %30 = vector.shape_cast %6 : vector<1x128xf32> to vector<1x128xf32>
    %31 = vector.broadcast %30 : vector<1x128xf32> to vector<32x128xf32>
    %32 = vector.broadcast %cst_7 : f32 to vector<32x128xf32>
    %33 = arith.select %22, %31, %32 : vector<32x128xi1>, vector<32x128xf32>
    %c0_8 = arith.constant 0 : index
    %c0_9 = arith.constant 0 : index
    %34 = vector.load %arg7[%c0_8, %c0_9] : memref<8x128xf32, #tpu.memory_space<vmem>>, vector<8x128xf32>
    %35 = vector.shape_cast %29 : vector<32x128xf32> to vector<4x8x128xf32>
    %cst_10 = arith.constant dense<0.000000e+00> : vector<8x128xf32>
    %36 = vector.multi_reduction <add>, %35, %cst_10 [0] : vector<4x8x128xf32> to vector<8x128xf32>
    %37 = arith.addf %34, %36 : vector<8x128xf32>
    %c0_11 = arith.constant 0 : index
    %c0_12 = arith.constant 0 : index
    %38 = vector.load %arg7[%c0_11, %c0_12] : memref<8x128xf32, #tpu.memory_space<vmem>>, vector<8x128xf32>
    tpu.vector_store %arg7[%c0_11, %c0_12], %37 {strides = array<i32>} : memref<8x128xf32, #tpu.memory_space<vmem>>, vector<8x128xf32>,
    %c0_13 = arith.constant 0 : index
    %c0_14 = arith.constant 0 : index
    %39 = vector.load %arg8[%c0_13, %c0_14] : memref<8x128xf32, #tpu.memory_space<vmem>>, vector<8x128xf32>
    %40 = vector.shape_cast %33 : vector<32x128xf32> to vector<4x8x128xf32>
    %cst_15 = arith.constant dense<0.000000e+00> : vector<8x128xf32>
    %41 = vector.multi_reduction <add>, %40, %cst_15 [0] : vector<4x8x128xf32> to vector<8x128xf32>
    %42 = arith.addf %39, %41 : vector<8x128xf32>
    %c0_16 = arith.constant 0 : index
    %c0_17 = arith.constant 0 : index
    %43 = vector.load %arg8[%c0_16, %c0_17] : memref<8x128xf32, #tpu.memory_space<vmem>>, vector<8x128xf32>
    tpu.vector_store %arg8[%c0_16, %c0_17], %42 {strides = array<i32>} : memref<8x128xf32, #tpu.memory_space<vmem>>, vector<8x128xf32>,
    %c1_i32 = arith.constant 1 : i32
    %44 = arith.cmpi eq, %arg1, %c1_i32 : i32
    %45 = arith.extui %44 : i1 to i32
    %c0_i32_18 = arith.constant 0 : i32
    %46 = arith.cmpi ne, %45, %c0_i32_18 : i32
    scf.if %46 {
      %c0_19 = arith.constant 0 : index
      %c0_20 = arith.constant 0 : index
      %47 = vector.load %arg7[%c0_19, %c0_20] : memref<8x128xf32, #tpu.memory_space<vmem>>, vector<8x128xf32>
      %c0_21 = arith.constant 0 : index
      %c0_22 = arith.constant 0 : index
      %48 = vector.load %arg5[%c0_21, %c0_22] : memref<8x128xf32, #tpu.memory_space<vmem>>, vector<8x128xf32>
      tpu.vector_store %arg5[%c0_21, %c0_22], %47 {strides = array<i32>} : memref<8x128xf32, #tpu.memory_space<vmem>>, vector<8x128xf32>,
      %c0_23 = arith.constant 0 : index
      %c0_24 = arith.constant 0 : index
      %49 = vector.load %arg8[%c0_23, %c0_24] : memref<8x128xf32, #tpu.memory_space<vmem>>, vector<8x128xf32>
      %c0_25 = arith.constant 0 : index
      %c0_26 = arith.constant 0 : index
      %50 = vector.load %arg6[%c0_25, %c0_26] : memref<8x128xf32, #tpu.memory_space<vmem>>, vector<8x128xf32>
      tpu.vector_store %arg6[%c0_25, %c0_26], %49 {strides = array<i32>} : memref<8x128xf32, #tpu.memory_space<vmem>>, vector<8x128xf32>,
    } else {
    }
    return
  }
  func.func @transform_0(%arg0: i32, %arg1: i32) -> (i32, i32) {
    %c2_i32 = arith.constant 2 : i32
    %0 = arith.muli %arg0, %c2_i32 : i32
    %1 = arith.addi %0, %arg1 : i32
    %c0_i32 = arith.constant 0 : i32
    %c0_i32_0 = arith.constant 0 : i32
    return %1, %c0_i32 : i32, i32
  }
  func.func @transform_1(%arg0: i32, %arg1: i32) -> (i32, i32) {
    %c2_i32 = arith.constant 2 : i32
    %0 = arith.muli %arg0, %c2_i32 : i32
    %1 = arith.addi %0, %arg1 : i32
    %c0_i32 = arith.constant 0 : i32
    %c0_i32_0 = arith.constant 0 : i32
    return %1, %c0_i32 : i32, i32
  }
  func.func @transform_2(%arg0: i32, %arg1: i32) -> (i32, i32) {
    %c0_i32 = arith.constant 0 : i32
    %c0_i32_0 = arith.constant 0 : i32
    %c0_i32_1 = arith.constant 0 : i32
    return %c0_i32, %c0_i32_0 : i32, i32
  }
  func.func @transform_3(%arg0: i32, %arg1: i32) -> (i32, i32) {
    %c0_i32 = arith.constant 0 : i32
    %c0_i32_0 = arith.constant 0 : i32
    return %arg0, %c0_i32 : i32, i32
  }
  func.func @transform_4(%arg0: i32, %arg1: i32) -> (i32, i32) {
    %c0_i32 = arith.constant 0 : i32
    %c0_i32_0 = arith.constant 0 : i32
    return %arg0, %c0_i32 : i32, i32
  }
}

</mosaic_0001>

<llo_original>
// kernel: tpu_custom_call.1
$region0: #{tpu_custom_call.1}
  #allocation0 [shape = 'u32[]', space=smem, size = 0x4, offset = 0x4, fixed_abs, tag = 'smem constant byte address 0x4 - core index']
  #allocation1 [shape = 'u32[144,128]{1,0:T(1,128)}', space=vmem, size = 0x12000, scoped, tag = 'internal scratch']
  #allocation2 [shape = 'f32[8,128]{1,0:T(8,128)}', space=vmem, size = 0x1000, scoped, tag = 'scratch operand']
  #allocation3 [shape = 'f32[8,128]{1,0:T(8,128)}', space=vmem, size = 0x1000, scoped, tag = 'scratch operand']
  %s0 = inlined_call_operand.hbm [shape: f32[35,128], index: 0, kind: input, shape index: {}]
  %s1 = inlined_call_operand.hbm [shape: s8[35,128], index: 1, kind: input, shape index: {}]
  %s2 = inlined_call_operand.vmem [shape: f32[1,128], index: 2, kind: input, shape index: {}]
  %s3 = inlined_call_operand.hbm [shape: f32[8,128], index: 3, kind: output, shape index: {0}]
  %s4 = inlined_call_operand.hbm [shape: f32[8,128], index: 4, kind: output, shape index: {1}]
  %5 = xla_tuple %s3, %s4
  %s6 = sld [smem:[#allocation0]]
  $region69: #{tpu_custom_call.1} parent=0
    _
  %s8 = ssub.s32 1, %s6
  %s9 = scalar_select 0, %s8, %s6
  $region1: #{tpu_custom_call.1} parent=0
    #allocation4 [shape = 'u8[32768]{0}', space=vmem, size = 0x8000, scoped, tag = 'input window, operand 0']
    #allocation5 [shape = 's32[2]{0}', space=sflag, size = 0x8, scoped, tag = 'scoped memory for tpu_custom_call.1']
    #allocation6 [shape = 's32[2]{0}', space=sflag, size = 0x8, scoped, tag = 'scoped memory for tpu_custom_call.1']
    #allocation7 [shape = 'u8[8192]{0}', space=vmem, size = 0x2000, scoped, tag = 'input window, operand 1']
    #allocation8 [shape = 's32[2]{0}', space=sflag, size = 0x8, scoped, tag = 'scoped memory for tpu_custom_call.1']
    #allocation9 [shape = 'u8[4096]{0}', space=vmem, size = 0x1000, scoped, tag = 'output window, operand 0, single buffered']
    #allocation10 [shape = 'u8[4096]{0}', space=vmem, size = 0x1000, scoped, tag = 'output window, operand 1, single buffered']
    #allocation11 [shape = 's32[1]{0}', space=sflag, size = 0x4, scoped, tag = 'scoped memory for tpu_custom_call.1']
    %10 = vsyncpa [#allocation5], 0
    %s11 = scalar_lea.sflag [#allocation5], 1
    %12 = vsyncpa %s11, 0
    %13 = vsyncpa [#allocation8], 0
    %s14 = scalar_lea.sflag [#allocation8], 1
    %15 = vsyncpa %s14, 0
    %16 = vsyncpa [#allocation6], 0
    %17 = vsyncpa [#allocation11], 0
    loop: start=0, step=1, limit=4
    $region2: #{tpu_custom_call.1} parent=1 // loop_pre_header
      _
    $region3: #{tpu_custom_call.1} parent=1 // loop_header
      %s19 = sphi 0, %s23
      %p20 = scmp.ge.s32.totalorder %s19, 4
      %s26 = sphi 0, %s38
      %s27 = sphi 0, %s34
      %s28 = sphi 0, %s26
      %s29 = sphi 0, %s27
      %s30 = sphi 0, %s28
      %s31 = sphi 0, %s29
      %s45 = sphi 0, %s47
      %s48 = sphi 0, %s45
      %s49 = sphi 0, %s48
      %s65 = sphi 0, %s49
      %s75 = sphi 0, %s77
      %s78 = sphi 0, %s75
      %s79 = sphi 0, %s78
      %s95 = sphi 0, %s79
      %s99 = sphi 0, %s99
      %s101 = sphi 0, %s99
      %s102 = sphi 0, %s101
      %s116 = sphi 0, %s102
      %s122 = sphi 0, %s124
      %s125 = sphi 0, %s122
      %s126 = sphi 0, %s125
      %s142 = sphi 0, %s126
      %s148 = sphi 0, %s150
      %s151 = sphi 0, %s148
      %s152 = sphi 0, %s151
      %s168 = sphi 0, %s152
    $region4: #{tpu_custom_call.1} parent=1 // loop_header_branch
      %22 = sbr.rel (%p20) target = $region8
    $region5: #{tpu_custom_call.1} parent=1 // loop_body
      %s24 = ssub.s32 %s19, 1
      %s25 = ssub.s32 %s19, 2
      %s32 = sadd.s32 1, %s27
      %p33 = scmp.ge.s32.totalorder %s32, 2
      %s34 = scalar_select %p33, 0, %s32
      %s35 = sadd.s32 1, %s26
      %s36 = scalar_select %p33, %s35, %s26
      %p37 = scmp.ge.s32.totalorder %s36, 1
      %s38 = scalar_select %p37, 0, %s36
      %s39 = smul.u32 %s26, 2
      %s40 = sadd.s32 %s39, %s27
      %s41 = smul.u32 %s38, 2
      %s42 = sadd.s32 %s41, %s34
      %s43 = ssub.s32 %s40, %s42
      %p44 = scmp.eq.s32.totalorder %s43, 0
      %s46 = sadd.s32 %s45, 1
      %s47 = scalar_select %p44, %s45, %s46
      %p50 = pneg %p44
      %p51 = scmp.eq.s32.totalorder %s19, 1
      %p52 = por %p50, %p51
      %p53 = scmp.ne.s32.totalorder %s45, %s48
      %p54 = scmp.eq.s32.totalorder %s19, 0
      %p55 = por %p53, %p54
      %p56 = scmp.ne.s32.totalorder %s45, %s48
      %p57 = scmp.eq.s32.totalorder %s24, 1
      %p58 = por %p56, %p57
      %p59 = scmp.ne.s32.totalorder %s48, %s49
      %p60 = scmp.eq.s32.totalorder %s24, 0
      %p61 = por %p59, %p60
      %p62 = scmp.ne.s32.totalorder %s48, %s49
      %p63 = scmp.eq.s32.totalorder %s25, 1
      %p64 = por %p62, %p63
      %p66 = scmp.ne.s32.totalorder %s49, %s65
      %p67 = scmp.eq.s32.totalorder %s25, 0
      %p68 = por %p66, %p67
      %s69 = smul.u32 %s26, 2
      %s70 = sadd.s32 %s69, %s27
      %s71 = smul.u32 %s38, 2
      %s72 = sadd.s32 %s71, %s34
      %s73 = ssub.s32 %s70, %s72
      %p74 = scmp.eq.s32.totalorder %s73, 0
      %s76 = sadd.s32 %s75, 1
      %s77 = scalar_select %p74, %s75, %s76
      %p80 = pneg %p74
      %p81 = scmp.eq.s32.totalorder %s19, 1
      %p82 = por %p80, %p81
      %p83 = scmp.ne.s32.totalorder %s75, %s78
      %p84 = scmp.eq.s32.totalorder %s19, 0
      %p85 = por %p83, %p84
      %p86 = scmp.ne.s32.totalorder %s75, %s78
      %p87 = scmp.eq.s32.totalorder %s24, 1
      %p88 = por %p86, %p87
      %p89 = scmp.ne.s32.totalorder %s78, %s79
      %p90 = scmp.eq.s32.totalorder %s24, 0
      %p91 = por %p89, %p90
      %p92 = scmp.ne.s32.totalorder %s78, %s79
      %p93 = scmp.eq.s32.totalorder %s25, 1
      %p94 = por %p92, %p93
      %p96 = scmp.ne.s32.totalorder %s79, %s95
      %p97 = scmp.eq.s32.totalorder %s25, 0
      %p98 = por %p96, %p97
      %s100 = sadd.s32 %s99, 1
      %p103 = scmp.eq.s32.totalorder %s19, 1
      %p104 = scmp.ne.s32.totalorder %s99, %s101
      %p105 = scmp.eq.s32.totalorder %s19, 0
      %p106 = por %p104, %p105
      %p107 = scmp.ne.s32.totalorder %s99, %s101
      %p108 = scmp.eq.s32.totalorder %s24, 1
      %p109 = por %p107, %p108
      %p110 = scmp.ne.s32.totalorder %s101, %s102
      %p111 = scmp.eq.s32.totalorder %s24, 0
      %p112 = por %p110, %p111
      %p113 = scmp.ne.s32.totalorder %s101, %s102
      %p114 = scmp.eq.s32.totalorder %s25, 1
      %p115 = por %p113, %p114
      %p117 = scmp.ne.s32.totalorder %s102, %s116
      %p118 = scmp.eq.s32.totalorder %s25, 0
      %p119 = por %p117, %p118
      %s120 = ssub.s32 %s26, %s38
      %p121 = scmp.eq.s32.totalorder %s120, 0
      %s123 = sadd.s32 %s122, 1
      %s124 = scalar_select %p121, %s122, %s123
      %p127 = pneg %p121
      %p128 = scmp.eq.s32.totalorder %s19, 1
      %p129 = por %p127, %p128
      %p130 = scmp.ne.s32.totalorder %s122, %s125
      %p131 = scmp.eq.s32.totalorder %s19, 0
      %p132 = por %p130, %p131
      %p133 = scmp.ne.s32.totalorder %s122, %s125
      %p134 = scmp.eq.s32.totalorder %s24, 1
      %p135 = por %p133, %p134
      %p136 = scmp.ne.s32.totalorder %s125, %s126
      %p137 = scmp.eq.s32.totalorder %s24, 0
      %p138 = por %p136, %p137
      %p139 = scmp.ne.s32.totalorder %s125, %s126
      %p140 = scmp.eq.s32.totalorder %s25, 1
      %p141 = por %p139, %p140
      %p143 = scmp.ne.s32.totalorder %s126, %s142
      %p144 = scmp.eq.s32.totalorder %s25, 0
      %p145 = por %p143, %p144
      %s146 = ssub.s32 %s26, %s38
      %p147 = scmp.eq.s32.totalorder %s146, 0
      %s149 = sadd.s32 %s148, 1
      %s150 = scalar_select %p147, %s148, %s149
      %p153 = pneg %p147
      %p154 = scmp.eq.s32.totalorder %s19, 1
      %p155 = por %p153, %p154
      %p156 = scmp.ne.s32.totalorder %s148, %s151
      %p157 = scmp.eq.s32.totalorder %s19, 0
      %p158 = por %p156, %p157
      %p159 = scmp.ne.s32.totalorder %s148, %s151
      %p160 = scmp.eq.s32.totalorder %s24, 1
      %p161 = por %p159, %p160
      %p162 = scmp.ne.s32.totalorder %s151, %s152
      %p163 = scmp.eq.s32.totalorder %s24, 0
      %p164 = por %p162, %p163
      %p165 = scmp.ne.s32.totalorder %s151, %s152
      %p166 = scmp.eq.s32.totalorder %s25, 1
      %p167 = por %p165, %p166
      %p169 = scmp.ne.s32.totalorder %s152, %s168
      %p170 = scmp.eq.s32.totalorder %s25, 0
      %p171 = por %p169, %p170
      %p172 = scmp.le.s32.totalorder 1, %s19
      %p173 = scmp.lt.s32.totalorder %s19, 3
      %p174 = pnand %p172, %p173
      %p175 = pneg %p174
      // Predicated region
      $region9: #{tpu_custom_call.1} parent=5 // pred_check
        _
      $region10: #{tpu_custom_call.1} parent=5 // pred_check_branch
        %177 = sbr.rel (%p174) target = $region12
      $region11: #{tpu_custom_call.1} parent=5 // pred_region
        %s178 = ssub.s32 %s19, 1
        // Predicated region
        $region13: #{tpu_custom_call.1} parent=11 // pred_check
          %p179 = pneg %p112
        $region14: #{tpu_custom_call.1} parent=11 // pred_check_branch
          %181 = sbr.rel (%p179) target = $region16
        $region15: #{tpu_custom_call.1} parent=11 // pred_region
          _
        $region16: #{tpu_custom_call.1} parent=11 // pred_fallthru
          _
      $region12: #{tpu_custom_call.1} parent=5 // pred_fallthru
        _
      %p182 = scmp.lt.s32.totalorder %s19, 2
      // Predicated region
      $region17: #{tpu_custom_call.1} parent=5 // pred_check
        %p183 = pneg %p182
      $region18: #{tpu_custom_call.1} parent=5 // pred_check_branch
        %185 = sbr.rel (%p183) target = $region20
      $region19: #{tpu_custom_call.1} parent=5 // pred_region
        // Predicated region
        $region21: #{tpu_custom_call.1} parent=19 // pred_check
          %p186 = pneg %p55
        $region22: #{tpu_custom_call.1} parent=19 // pred_check_branch
          %188 = sbr.rel (%p186) target = $region24
        $region23: #{tpu_custom_call.1} parent=19 // pred_region
          %s189 = sand.u32 %s45, 1
          %s190 = scalar_lea.sflag [#allocation5], %s189
          %s191 = sand.u32 %s45, 1
          %s192 = smul.addr %s191, 32
          %s193 = scalar_lea.vmem [#allocation4], %s192
          %s194 = smul.u32 %s26, 2
          %s195 = sadd.s32 %s194, %s27
          %s196 = smul.u32 4, %s195
          %s197 = ssub.s32 5, %s196
          %p198 = scmp.lt.s32.totalorder %s197, 4
          %s199 = scalar_select %p198, %s197, 4
          %s200 = smul.u32 128, %s199
          %s202 = ssub.s32 512, %s200
          %203 = vsyncadd %s190, %s202
          %p204 = scmp.ne.s32.totalorder 0, %s200
          %s205 = smul.addr %s196, 128
          %s206 = scalar_lea.hbm %s0, %s205
          %s207 = smul.u32 8, %s199
          %s208 = sshll.u32 %s193, 4
          %s209 = int_to_ptr.vmem [resolvable:$true] %s208
          %s210 = sshll.u32 %s207, 4
          %214 = dma.hbm_to_vmem [thread:$0]  (%p204), %s206, %s210, %s209, %s190, 128, 128, 8
        $region24: #{tpu_custom_call.1} parent=19 // pred_fallthru
          _
        // Predicated region
        $region25: #{tpu_custom_call.1} parent=19 // pred_check
          %p215 = pneg %p85
        $region26: #{tpu_custom_call.1} parent=19 // pred_check_branch
          %217 = sbr.rel (%p215) target = $region28
        $region27: #{tpu_custom_call.1} parent=19 // pred_region
          %s218 = sand.u32 %s75, 1
          %s219 = scalar_lea.sflag [#allocation8], %s218
          %s220 = sand.u32 %s75, 1
          %s221 = smul.addr %s220, 8
          %s222 = scalar_lea.vmem [#allocation7], %s221
          %s223 = smul.u32 %s26, 2
          %s224 = sadd.s32 %s223, %s27
          %s225 = smul.u32 4, %s224
          %s226 = ssub.s32 5, %s225
          %p227 = scmp.lt.s32.totalorder %s226, 4
          %s228 = scalar_select %p227, %s226, 4
          %s229 = smul.u32 32, %s228
          %s231 = ssub.s32 128, %s229
          %232 = vsyncadd %s219, %s231
          %p233 = scmp.ne.s32.totalorder 0, %s229
          %s234 = smul.addr %s225, 32
          %s235 = scalar_lea.hbm %s1, %s234
          %s236 = smul.u32 2, %s228
          %s237 = sshll.u32 %s222, 4
          %s238 = int_to_ptr.vmem [resolvable:$true] %s237
          %s239 = sshll.u32 %s236, 4
          %243 = dma.hbm_to_vmem [thread:$0]  (%p233), %s235, %s239, %s238, %s219, 32, 32, 2
        $region28: #{tpu_custom_call.1} parent=19 // pred_fallthru
          _
      $region20: #{tpu_custom_call.1} parent=5 // pred_fallthru
        _
      %p244 = scmp.le.s32.totalorder 1, %s19
      %p245 = scmp.lt.s32.totalorder %s19, 3
      %p246 = pnand %p244, %p245
      %p247 = pneg %p246
      // Predicated region
      $region29: #{tpu_custom_call.1} parent=5 // pred_check
        _
      $region30: #{tpu_custom_call.1} parent=5 // pred_check_branch
        %249 = sbr.rel (%p246) target = $region32
      $region31: #{tpu_custom_call.1} parent=5 // pred_region
        %s250 = ssub.s32 %s19, 1
        %s251 = sand.u32 %s48, 1
        %s252 = scalar_lea.sflag [#allocation5], %s251
        %s253 = sand.u32 %s48, 1
        %s254 = smul.addr %s253, 32
        %s255 = scalar_lea.vmem [#allocation4], %s254
        // Predicated region
        $region33: #{tpu_custom_call.1} parent=31 // pred_check
          %p256 = pneg %p61
        $region34: #{tpu_custom_call.1} parent=31 // pred_check_branch
          %258 = sbr.rel (%p256) target = $region36
        $region35: #{tpu_custom_call.1} parent=31 // pred_region
          %259 = dma.done %s252, 512
        $region36: #{tpu_custom_call.1} parent=31 // pred_fallthru
          _
        %s260 = sand.u32 %s78, 1
        %s261 = scalar_lea.sflag [#allocation8], %s260
        %s262 = sand.u32 %s78, 1
        %s263 = smul.addr %s262, 8
        %s264 = scalar_lea.vmem [#allocation7], %s263
        // Predicated region
        $region37: #{tpu_custom_call.1} parent=31 // pred_check
          %p265 = pneg %p91
        $region38: #{tpu_custom_call.1} parent=31 // pred_check_branch
          %267 = sbr.rel (%p265) target = $region40
        $region39: #{tpu_custom_call.1} parent=31 // pred_region
          %268 = dma.done %s261, 128
        $region40: #{tpu_custom_call.1} parent=31 // pred_fallthru
          _
        %s269 = sand.u32 %s48, 1
        %s270 = scalar_lea.sflag [#allocation5], %s269
        %s271 = sand.u32 %s48, 1
        %s272 = smul.addr %s271, 32
        %s273 = scalar_lea.vmem [#allocation4], %s272
        %p274 = pneg %p61
        %p275 = pneg %p58
        %s276 = sand.u32 %s78, 1
        %s277 = scalar_lea.sflag [#allocation8], %s276
        %s278 = sand.u32 %s78, 1
        %s279 = smul.addr %s278, 8
        %s280 = scalar_lea.vmem [#allocation7], %s279
        %p281 = pneg %p91
        %p282 = pneg %p88
        %p283 = pneg %p112
        %p284 = pneg %p109
        %p285 = pneg %p138
        %p286 = pneg %p135
        %p287 = pneg %p164
        %p288 = pneg %p161
        %s289 = smul.u32 %s28, 2
        %s290 = sadd.s32 %s289, %s29
        %s291 = smul.u32 4, %s290
        %s292 = ssub.s32 5, %s291
        %p293 = scmp.lt.s32.totalorder %s292, 4
        %s294 = scalar_select %p293, %s292, 4
        %s295 = smul.u32 128, %s294
        %s296 = smul.u32 %s28, 2
        %s297 = sadd.s32 %s296, %s29
        %s298 = smul.u32 4, %s297
        %s299 = ssub.s32 5, %s298
        %p300 = scmp.lt.s32.totalorder %s299, 4
        %s301 = scalar_select %p300, %s299, 4
        %s302 = smul.u32 32, %s301
        %p303 = scmp.eq.s32.totalorder %s29, 0
        // Predicated region
        $region41: #{tpu_custom_call.1} parent=31 // pred_check
          %p304 = pneg %p303
        $region42: #{tpu_custom_call.1} parent=31 // pred_check_branch
          %306 = sbr.rel (%p304) target = $region44
        $region43: #{tpu_custom_call.1} parent=31 // pred_region
          %307 = vst [vmem:[#allocation2] sm:$0xff] 0.0
          %308 = vst [vmem:[#allocation3] sm:$0xff] 0.0
        $region44: #{tpu_custom_call.1} parent=31 // pred_fallthru
          _
        %v309 = vld [vmem:[%s255] sm:$0xff]
        %v310 = vld [vmem:[%s255 + $0x8] sm:$0xff]
        %v311 = vld [vmem:[%s255 + $0x10] sm:$0xff]
        %v312 = vld [vmem:[%s255 + $0x18] sm:$0xff]
        %v313 = vld [vmem:[%s264] sm:$0x3]
        %v314 = vld [vmem:[%s264 + $0x2] sm:$0x3]
        %v315 = vld [vmem:[%s264 + $0x4] sm:$0x3]
        %v316 = vld [vmem:[%s264 + $0x6] sm:$0x3]
        %v317 = vunpack.c.0.s8 %v313
        %v318 = vunpack.c.0.s8 %v314
        %v319 = vunpack.c.0.s8 %v315
        %v320 = vunpack.c.0.s8 %v316
        %v321 = vld [vmem:[%s2] sm:$0x1]
        %v322 = vlaneseq
        %v323 = vand.u32 %v322, 127
        %v324 = vlaneseq
        %v325 = vshrl.u32 %v324, 7
        %v326 = vadd.s32 %v325, 8
        %v327 = vadd.s32 %v325, 16
        %v328 = vadd.s32 %v325, 24
        %v329 = vand.u32 %v323, 3
        %s330 = smul.u32 %s28, 2
        %s331 = sadd.s32 %s330, %s29
        %s332 = smul.u32 %s331, 4096
        %v333 = vmul.u32 %v325, 128
        %v334 = vmul.u32 %v326, 128
        %v335 = vmul.u32 %v327, 128
        %v336 = vmul.u32 %v328, 128
        %v337 = vstv %s332
        %v338 = vadd.s32 %v337, %v333
        %v339 = vadd.s32 %v337, %v334
        %v340 = vadd.s32 %v337, %v335
        %v341 = vadd.s32 %v337, %v336
        %v342 = vadd.s32 %v338, %v323
        %v343 = vadd.s32 %v339, %v323
        %v344 = vadd.s32 %v340, %v323
        %v345 = vadd.s32 %v341, %v323
        %vm346 = vcmp.eq.s32.totalorder %v329, %v317
        %vm347 = vcmp.eq.s32.totalorder %v329, %v318
        %vm348 = vcmp.eq.s32.totalorder %v329, %v319
        %vm349 = vcmp.eq.s32.totalorder %v329, %v320
        %vm350 = vcmp.lt.s32.totalorder %v342, 4400
        %vm351 = vcmp.lt.s32.totalorder %v343, 4400
        %vm352 = vcmp.lt.s32.totalorder %v344, 4400
        %vm353 = vcmp.lt.s32.totalorder %v345, 4400
        %vm354 = vmand %vm346, %vm350
        %vm355 = vmand %vm347, %vm351
        %vm356 = vmand %vm348, %vm352
        %vm357 = vmand %vm349, %vm353
        %v358 = vadd.f32 %v309, 1e-07
        %v359 = vadd.f32 %v310, 1e-07
        %v360 = vadd.f32 %v311, 1e-07
        %v361 = vadd.f32 %v312, 1e-07
        %v362 = vlog2.pop %v358
        %v363 = vmul.f32 %v362, 0.6931472
        %v364 = vlog2.pop %v359
        %v365 = vmul.f32 %v364, 0.6931472
        %v366 = vlog2.pop %v360
        %v367 = vmul.f32 %v366, 0.6931472
        %v368 = vlog2.pop %v361
        %v369 = vmul.f32 %v368, 0.6931472
        %v371 = vlaneseq
        %v372 = vshrl.u32 %v371, 7
        %v373 = vsub.s32 0, %v372
        %v374 = vrot.slane %v321, %v373
        %v376 = vmul.f32 %v374, %v363
        %v377 = vmul.f32 %v374, %v365
        %v378 = vmul.f32 %v374, %v367
        %v379 = vmul.f32 %v374, %v369
        %v380 = vsel %vm354, %v376, 0.0
        %v381 = vsel %vm355, %v377, 0.0
        %v382 = vsel %vm356, %v378, 0.0
        %v383 = vsel %vm357, %v379, 0.0
        %v384 = vsel %vm354, %v374, 0.0
        %v385 = vsel %vm355, %v374, 0.0
        %v386 = vsel %vm356, %v374, 0.0
        %v387 = vsel %vm357, %v374, 0.0
        %v388 = vld [vmem:[#allocation2] sm:$0xff]
        %v389 = vadd.f32 %v380, %v381
        %v390 = vadd.f32 %v389, %v382
        %v391 = vadd.f32 %v390, %v383
        %v392 = vadd.f32 %v388, %v391
        %393 = vst [vmem:[#allocation2] sm:$0xff] %v392
        %v394 = vld [vmem:[#allocation3] sm:$0xff]
        %v395 = vadd.f32 %v384, %v385
        %v396 = vadd.f32 %v395, %v386
        %v397 = vadd.f32 %v396, %v387
        %v398 = vadd.f32 %v394, %v397
        %399 = vst [vmem:[#allocation3] sm:$0xff] %v398
        %p400 = scmp.eq.s32.totalorder %s29, 1
        // Predicated region
        $region45: #{tpu_custom_call.1} parent=31 // pred_check
          %p401 = pneg %p400
        $region46: #{tpu_custom_call.1} parent=31 // pred_check_branch
          %403 = sbr.rel (%p401) target = $region48
        $region47: #{tpu_custom_call.1} parent=31 // pred_region
          %v404 = vld [vmem:[#allocation2] sm:$0xff]
          %405 = vst [vmem:[#allocation9] sm:$0xff] %v404
          %v406 = vld [vmem:[#allocation3] sm:$0xff]
          %407 = vst [vmem:[#allocation10] sm:$0xff] %v406
        $region48: #{tpu_custom_call.1} parent=31 // pred_fallthru
          _
        // Predicated region
        $region49: #{tpu_custom_call.1} parent=31 // pred_check
          %p408 = pneg %p135
        $region50: #{tpu_custom_call.1} parent=31 // pred_check_branch
          %410 = sbr.rel (%p408) target = $region52
        $region51: #{tpu_custom_call.1} parent=31 // pred_region
          %s412 = ssub.s32 128, 128
          %413 = vsyncadd [#allocation6], %s412
          %s414 = smul.addr %s28, 128
          %s415 = scalar_lea.hbm %s3, %s414
          %s417 = sshll.u32 [#allocation9], 4
          %s418 = int_to_ptr.vmem [resolvable:$true] %s417
          %420 = dma.vmem_to_hbm [thread:$0]  %s418, 128, %s415, [#allocation6]
        $region52: #{tpu_custom_call.1} parent=31 // pred_fallthru
          _
        // Predicated region
        $region53: #{tpu_custom_call.1} parent=31 // pred_check
          %p421 = pneg %p161
        $region54: #{tpu_custom_call.1} parent=31 // pred_check_branch
          %423 = sbr.rel (%p421) target = $region56
        $region55: #{tpu_custom_call.1} parent=31 // pred_region
          %s425 = ssub.s32 128, 128
          %426 = vsyncadd [#allocation11], %s425
          %s427 = smul.addr %s28, 128
          %s428 = scalar_lea.hbm %s4, %s427
          %s430 = sshll.u32 [#allocation10], 4
          %s431 = int_to_ptr.vmem [resolvable:$true] %s430
          %433 = dma.vmem_to_hbm [thread:$0]  %s431, 128, %s428, [#allocation11]
        $region56: #{tpu_custom_call.1} parent=31 // pred_fallthru
          _
        // Predicated region
        $region57: #{tpu_custom_call.1} parent=31 // pred_check
          %p434 = pneg %p135
        $region58: #{tpu_custom_call.1} parent=31 // pred_check_branch
          %436 = sbr.rel (%p434) target = $region60
        $region59: #{tpu_custom_call.1} parent=31 // pred_region
          %437 = dma.done [#allocation6], 128
        $region60: #{tpu_custom_call.1} parent=31 // pred_fallthru
          _
        // Predicated region
        $region61: #{tpu_custom_call.1} parent=31 // pred_check
          %p438 = pneg %p161
        $region62: #{tpu_custom_call.1} parent=31 // pred_check_branch
          %440 = sbr.rel (%p438) target = $region64
        $region63: #{tpu_custom_call.1} parent=31 // pred_region
          %441 = dma.done [#allocation11], 128
        $region64: #{tpu_custom_call.1} parent=31 // pred_fallthru
          _
      $region32: #{tpu_custom_call.1} parent=5 // pred_fallthru
        _
      %p442 = scmp.le.s32.totalorder 2, %s19
      // Predicated region
      $region65: #{tpu_custom_call.1} parent=5 // pred_check
        %p443 = pneg %p442
      $region66: #{tpu_custom_call.1} parent=5 // pred_check_branch
        %445 = sbr.rel (%p443) target = $region68
      $region67: #{tpu_custom_call.1} parent=5 // pred_region
        %s446 = ssub.s32 %s19, 2
      $region68: #{tpu_custom_call.1} parent=5 // pred_fallthru
        _
    $region6: #{tpu_custom_call.1} parent=1 // loop_footer
      %s23 = sadd.s32 1, %s19
    $region7: #{tpu_custom_call.1} parent=1 // loop_footer_branch
      %18 = sbr.rel target = $region3
    $region8: #{tpu_custom_call.1} parent=1 // loop_exit
      _
    %447 = vsyncpa [#allocation5], 1
    %s448 = scalar_lea.sflag [#allocation5], 1
    %449 = vsyncpa %s448, 1
    %450 = vsyncpa [#allocation8], 1
    %s451 = scalar_lea.sflag [#allocation8], 1
    %452 = vsyncpa %s451, 1
    %453 = vsyncpa [#allocation6], 1
    %s454 = scalar_lea.sflag [#allocation6], 1
    %455 = vsyncpa %s454, 1
    %456 = vsyncpa [#allocation11], 1

</llo_original>
